<compile_context>
chip_gen: v7x
topology: tpu7x:2x2x1
jax: 0.10.0
libtpu: 0.0.40
codegen_flags: <defaults>
</compile_context>

<pallas_src>
import functools

import jax
import jax.numpy as jnp
from jax.experimental import pallas as pl
from jax.experimental.pallas import tpu as pltpu


def _attention_kernel(x_ref, wqkv_ref, sel_ref, kmask_ref, bias_ref,
                      gamma_ref, beta_ref, o_ref, *,
                      batch, seq_len, num_heads, scale, eps):
    emb = x_ref.shape[1]
    rows = batch * seq_len
    hs = num_heads * seq_len

    # ---- fused QKV projection: one MXU pass over all batch rows ------------
    # bf16 operands (MXU-native on v6e/v7x), f32 accumulate.
    x2 = x_ref[...].astype(jnp.bfloat16)                                 # (B*S, E)
    qkv = jnp.dot(x2, wqkv_ref[...],
                  preferred_element_type=jnp.float32)                    # (B*S, 3E) f32

    # The only lane slices in the kernel: three width-E slices of the fused
    # projection.  Leading-dim (8-aligned) reshapes are layout-preserving.
    q3 = qkv[:, 0:emb].reshape(batch, seq_len, emb)                      # (B, S, E)
    k3 = qkv[:, emb:2 * emb].reshape(batch, seq_len, emb)                # (B, S, E)
    v3 = qkv[:, 2 * emb:3 * emb].reshape(batch, seq_len, emb)            # (B, S, E)

    # ---- head-batched attention (no per-head slicing) -----------------------
    # sel[h, 0, e] = 1.0 iff column e belongs to head h.  Broadcasting q along
    # a new head axis and masking columns gives
    #   qexp[b, h*S+i, e] = q[b, i, e] * sel_h[e]
    # so one flash-pattern einsum produces every head's scores at once.
    sel = sel_ref[...]                                                   # (H, 1, E)
    qexp = (q3[:, None, :, :] * sel).reshape(batch, hs, emb)             # (B, H*S, E)

    scores = jnp.einsum('bne,bje->bnj', qexp, k3,
                        preferred_element_type=jnp.float32) * scale      # (B, H*S, S)

    # Key mask: one compare, broadcast along the (head, query) sublane axis.
    scores = jnp.where(kmask_ref[...] == 0, -10000.0, scores)

    # Numerically-stable softmax over keys (exact divide; approx reciprocal is
    # not worth the accuracy loss at this size).
    m = jnp.max(scores, axis=-1, keepdims=True)
    e = jnp.exp(scores - m)
    p = e / jnp.sum(e, axis=-1, keepdims=True)

    # Relative bias is added AFTER softmax (rows of p no longer sum to 1) —
    # exact reproduction of the PyTorch module; do not "fix".
    p = p + bias_ref[...]                                                # (1, H*S, S) bcast

    # out_big[b, h*S+i, e] = sum_j attn_h[b,i,j] * v[b,j,e]; for columns e that
    # belong to head h this IS head h's output; other columns are discarded by
    # the selector-combine below.  bf16 operands, f32 accumulate.
    out_big = jnp.einsum('bnj,bje->bne',
                         p.astype(jnp.bfloat16), v3.astype(jnp.bfloat16),
                         preferred_element_type=jnp.float32)             # (B, H*S, E)

    # Head combine: pick head h's own columns from its S-row block and add.
    # Aligned 8-row sublane slices + vector multiply-adds; no lane slices, no
    # VMEM scratch, no masked stores — output stays in vregs into LayerNorm.
    out = out_big[:, 0:seq_len, :] * sel[0]
    for h in range(1, num_heads):
        out = out + out_big[:, h * seq_len:(h + 1) * seq_len, :] * sel[h]
    out = out.reshape(rows, emb)                                         # (B*S, E)

    # ---- LayerNorm(emb) over the embedding axis -----------------------------
    mean = jnp.mean(out, axis=-1, keepdims=True)
    var = jnp.mean((out - mean) ** 2, axis=-1, keepdims=True)
    y = (out - mean) * jax.lax.rsqrt(var + eps)
    y = y * gamma_ref[...] + beta_ref[...]                               # (1, E) bcast
    o_ref[...] = y.astype(o_ref.dtype)


def attention_rel_scl(x, mask, wq, wk, wv, rel_bias, gamma, beta, *, emb_size):
    """x: (B, S, E) f32; mask: (B, S) int; rel_bias: (H, S, S) f32.

    Weights wq/wk/wv are stored as (in, out), i.e. the kernel computes x @ W
    (== PyTorch x @ W.T for nn.Linear weights)."""
    B, S, E = x.shape
    H = rel_bias.shape[0]
    D = E // H
    scale = float(emb_size) ** (-0.5)

    # One-time weight prep: fused (E, 3E) QKV weights, pre-cast to bf16.
    w_qkv = jnp.concatenate([wq, wk, wv], axis=1).astype(jnp.bfloat16)

    # Host-side layout plumbing (all tiny, one-time):
    x2d = x.reshape(B * S, E)
    # 0/1 head-column selector: sel[h, 0, e] = 1.0 iff e in [h*D, (h+1)*D)
    sel = jnp.repeat(jnp.eye(H, dtype=jnp.float32), D, axis=1).reshape(H, 1, E)
    kmask = mask.reshape(B, 1, S).astype(jnp.int32)
    bias_flat = rel_bias.reshape(1, H * S, S).astype(jnp.float32)        # row = h*S + i
    gamma2 = gamma.reshape(1, E).astype(jnp.float32)
    beta2 = beta.reshape(1, E).astype(jnp.float32)

    kernel = functools.partial(
        _attention_kernel, batch=B, seq_len=S, num_heads=H,
        scale=scale, eps=1e-5)

    vmem = lambda: pl.BlockSpec(memory_space=pltpu.MemorySpace.VMEM)

    out2d = pl.pallas_call(
        kernel,
        out_shape=jax.ShapeDtypeStruct((B * S, E), jnp.float32),
        in_specs=[vmem() for _ in range(7)],
        out_specs=vmem(),
    )(x2d, w_qkv, sel, kmask, bias_flat, gamma2, beta2)

    return out2d.reshape(B, S, E)


def reference(x, mask, wq, wk, wv, rel_bias, gamma, beta, *, emb_size):
    """Pure-JAX f32 reference mirroring the PyTorch forward."""
    B, S, E = x.shape
    H = rel_bias.shape[0]
    D = E // H
    scale = float(emb_size) ** (-0.5)
    q = (x @ wq).reshape(B, S, H, D).transpose(0, 2, 1, 3)
    k = (x @ wk).reshape(B, S, H, D).transpose(0, 2, 1, 3)
    v = (x @ wv).reshape(B, S, H, D).transpose(0, 2, 1, 3)
    attn = jnp.einsum('bhid,bhjd->bhij', q, k) * scale
    attn = jnp.where(mask[:, None, None, :] == 0, -10000.0, attn)
    attn = jax.nn.softmax(attn, axis=-1)
    attn = attn + rel_bias[None]
    out = jnp.einsum('bhij,bhjd->bhid', attn, v)
    out = out.transpose(0, 2, 1, 3).reshape(B, S, E)
    mean = out.mean(-1, keepdims=True)
    var = ((out - mean) ** 2).mean(-1, keepdims=True)
    return (out - mean) / jnp.sqrt(var + 1e-5) * gamma + beta


if __name__ == "__main__":
    # Small shapes consistent with the module. num_heads must be 8 because the
    # module hard-codes `.repeat(1, 8)` in the relative-bias gather.
    B, S, E, H = 2, 8, 32, 8

    key = jax.random.PRNGKey(0)
    k1, k2, k3, k4, k5, k6, k7, k8 = jax.random.split(key, 8)

    x = jax.random.normal(k1, (B, S, E), dtype=jnp.float32)
    # ensure every row has at least one unmasked key position
    mask = jnp.maximum(
        jax.random.bernoulli(k2, 0.7, (B, S)).astype(jnp.int32),
        jnp.eye(1, S, dtype=jnp.int32)[0][None, :].repeat(B, axis=0))

    # Linear weights stored as (in, out) so kernel does x @ W.
    wq = jax.random.normal(k3, (E, E), dtype=jnp.float32) * (E ** -0.5)
    wk = jax.random.normal(k4, (E, E), dtype=jnp.float32) * (E ** -0.5)
    wv = jax.random.normal(k5, (E, E), dtype=jnp.float32) * (E ** -0.5)

    # relative_bias_table: (2*S - 1, H). (Module inits zeros; use small randoms
    # so the bias-add path is actually exercised.)
    table = jax.random.normal(k6, (2 * S - 1, H), dtype=jnp.float32) * 0.02
    # relative_index[i, j] = i - j + S - 1  -> bias[h, i, j] = table[i - j + S - 1, h]
    idx = jnp.arange(S)[:, None] - jnp.arange(S)[None, :] + (S - 1)   # (S, S)
    rel_bias = jnp.transpose(table[idx], (2, 0, 1))                   # (H, S, S)

    # LayerNorm params (default init + tiny perturbation, deterministic).
    gamma = jnp.ones((E,), jnp.float32) + 0.01 * jax.random.normal(k7, (E,))
    beta = 0.01 * jax.random.normal(k8, (E,), dtype=jnp.float32)

    out = attention_rel_scl(x, mask, wq, wk, wv, rel_bias, gamma, beta,
                            emb_size=E)
    out = jax.block_until_ready(out)

    ref = reference(x, mask, wq, wk, wv, rel_bias, gamma, beta, emb_size=E)
    assert out.shape == (B, S, E)
    # Tolerance floor is set by the bf16 MXU operands (projection and attn@V);
    # the reference is pure f32.  Softmax/LayerNorm math is f32 and the
    # softmax divide is exact.
    assert jnp.allclose(out, ref, rtol=2e-2, atol=2e-2), (
        float(jnp.max(jnp.abs(out - ref))))

    print("KERNEL_OK")
</pallas_src>

<mosaic_0001>
module attributes {stable_mosaic.version = 11 : i64} {
  func.func @_attention_kernel(%arg0: memref<16x32xf32, #tpu.memory_space<vmem>>, %arg1: memref<32x96xbf16, #tpu.memory_space<vmem>>, %arg2: memref<8x1x32xf32, #tpu.memory_space<vmem>>, %arg3: memref<2x1x8xi32, #tpu.memory_space<vmem>>, %arg4: memref<1x64x8xf32, #tpu.memory_space<vmem>>, %arg5: memref<1x32xf32, #tpu.memory_space<vmem>>, %arg6: memref<1x32xf32, #tpu.memory_space<vmem>>, %arg7: memref<16x32xf32, #tpu.memory_space<vmem>>) attributes {dimension_semantics = [], scalar_prefetch = 0 : i64, scratch_operands = 0 : i64, tpu.core_type = #tpu.core_type<tc>} {
    %c0 = arith.constant 0 : index
    %c0_0 = arith.constant 0 : index
    %0 = vector.load %arg0[%c0, %c0_0] : memref<16x32xf32, #tpu.memory_space<vmem>>, vector<16x32xf32>
    %1 = arith.truncf %0 : vector<16x32xf32> to vector<16x32xbf16>
    %c0_1 = arith.constant 0 : index
    %c0_2 = arith.constant 0 : index
    %2 = vector.load %arg1[%c0_1, %c0_2] : memref<32x96xbf16, #tpu.memory_space<vmem>>, vector<32x96xbf16>
    %cst = arith.constant dense<0.000000e+00> : vector<16x96xf32>
    %3 = tpu.matmul %1, %2, %cst {dimension_numbers = #tpu.dot_dimension_numbers<[1], [0], [0], [1], [0, 0, 1, 1], [], []>} : vector<16x32xbf16>, vector<32x96xbf16>, vector<16x96xf32> -> vector<16x96xf32>
    %4 = vector.extract_strided_slice %3 {offsets = [0, 0], sizes = [16, 32], strides = [1, 1]} : vector<16x96xf32> to vector<16x32xf32>
    %5 = vector.shape_cast %4 : vector<16x32xf32> to vector<2x8x32xf32>
    %6 = vector.extract_strided_slice %3 {offsets = [0, 32], sizes = [16, 32], strides = [1, 1]} : vector<16x96xf32> to vector<16x32xf32>
    %7 = vector.shape_cast %6 : vector<16x32xf32> to vector<2x8x32xf32>
    %8 = vector.extract_strided_slice %3 {offsets = [0, 64], sizes = [16, 32], strides = [1, 1]} : vector<16x96xf32> to vector<16x32xf32>
    %9 = vector.shape_cast %8 : vector<16x32xf32> to vector<2x8x32xf32>
    %c0_3 = arith.constant 0 : index
    %c0_4 = arith.constant 0 : index
    %c0_5 = arith.constant 0 : index
    %10 = vector.load %arg2[%c0_3, %c0_4, %c0_5] : memref<8x1x32xf32, #tpu.memory_space<vmem>>, vector<8x1x32xf32>
    %11 = vector.shape_cast %5 : vector<2x8x32xf32> to vector<2x1x8x32xf32>
    %12 = vector.shape_cast %10 : vector<8x1x32xf32> to vector<1x8x1x32xf32>
    %13 = vector.broadcast %11 : vector<2x1x8x32xf32> to vector<2x8x8x32xf32>
    %14 = vector.broadcast %12 : vector<1x8x1x32xf32> to vector<2x8x8x32xf32>
    %15 = arith.mulf %13, %14 : vector<2x8x8x32xf32>
    %16 = vector.shape_cast %15 : vector<2x8x8x32xf32> to vector<2x64x32xf32>
    "tpu.trace_start"() <{level = 10 : i32, message = "bne,bje->bnj"}> : () -> ()
    %cst_6 = arith.constant dense<0.000000e+00> : vector<2x64x8xf32>
    %17 = tpu.matmul %16, %7, %cst_6 {dimension_numbers = #tpu.dot_dimension_numbers<[2], [2], [1], [1], [0, 0, 0, 1, 1, 1], [0], [0]>} : vector<2x64x32xf32>, vector<2x8x32xf32>, vector<2x64x8xf32> -> vector<2x64x8xf32>
    "tpu.trace_stop"() : () -> ()
    %cst_7 = arith.constant 0.176776692 : f32
    %18 = vector.broadcast %cst_7 : f32 to vector<2x64x8xf32>
    %19 = arith.mulf %17, %18 : vector<2x64x8xf32>
    %c0_8 = arith.constant 0 : index
    %c0_9 = arith.constant 0 : index
    %c0_10 = arith.constant 0 : index
    %20 = vector.load %arg3[%c0_8, %c0_9, %c0_10] : memref<2x1x8xi32, #tpu.memory_space<vmem>>, vector<2x1x8xi32>
    %c0_i32 = arith.constant 0 : i32
    %21 = vector.broadcast %c0_i32 : i32 to vector<2x1x8xi32>
    %22 = arith.cmpi eq, %20, %21 : vector<2x1x8xi32>
    %cst_11 = arith.constant -1.000000e+04 : f32
    %23 = vector.shape_cast %22 : vector<2x1x8xi1> to vector<2x1x8xi1>
    %24 = vector.broadcast %23 : vector<2x1x8xi1> to vector<2x64x8xi1>
    %25 = vector.broadcast %cst_11 : f32 to vector<2x64x8xf32>
    %26 = arith.select %24, %25, %19 : vector<2x64x8xi1>, vector<2x64x8xf32>
    %cst_12 = arith.constant dense<0xFF800000> : vector<2x64xf32>
    %27 = vector.multi_reduction <maximumf>, %26, %cst_12 [2] : vector<2x64x8xf32> to vector<2x64xf32>
    %28 = vector.shape_cast %27 : vector<2x64xf32> to vector<2x64x1xf32>
    %29 = vector.broadcast %28 : vector<2x64x1xf32> to vector<2x64x8xf32>
    %30 = arith.subf %26, %29 : vector<2x64x8xf32>
    %31 = math.exp %30 : vector<2x64x8xf32>
    %cst_13 = arith.constant dense<0.000000e+00> : vector<2x64xf32>
    %32 = vector.multi_reduction <add>, %31, %cst_13 [2] : vector<2x64x8xf32> to vector<2x64xf32>
    %33 = vector.shape_cast %32 : vector<2x64xf32> to vector<2x64x1xf32>
    %34 = vector.broadcast %33 : vector<2x64x1xf32> to vector<2x64x8xf32>
    %35 = arith.divf %31, %34 : vector<2x64x8xf32>
    %c0_14 = arith.constant 0 : index
    %c0_15 = arith.constant 0 : index
    %c0_16 = arith.constant 0 : index
    %36 = vector.load %arg4[%c0_14, %c0_15, %c0_16] : memref<1x64x8xf32, #tpu.memory_space<vmem>>, vector<1x64x8xf32>
    %37 = vector.broadcast %36 : vector<1x64x8xf32> to vector<2x64x8xf32>
    %38 = arith.addf %35, %37 : vector<2x64x8xf32>
    %39 = arith.truncf %38 : vector<2x64x8xf32> to vector<2x64x8xbf16>
    %40 = arith.truncf %9 : vector<2x8x32xf32> to vector<2x8x32xbf16>
    "tpu.trace_start"() <{level = 10 : i32, message = "bnj,bje->bne"}> : () -> ()
    %cst_17 = arith.constant dense<0.000000e+00> : vector<2x64x32xf32>
    %41 = tpu.matmul %39, %40, %cst_17 {dimension_numbers = #tpu.dot_dimension_numbers<[2], [1], [1], [2], [0, 0, 0, 1, 1, 2], [0], [0]>} : vector<2x64x8xbf16>, vector<2x8x32xbf16>, vector<2x64x32xf32> -> vector<2x64x32xf32>
    "tpu.trace_stop"() : () -> ()
    %42 = vector.extract_strided_slice %41 {offsets = [0, 0, 0], sizes = [2, 8, 32], strides = [1, 1, 1]} : vector<2x64x32xf32> to vector<2x8x32xf32>
    %43 = vector.extract_strided_slice %10 {offsets = [0, 0, 0], sizes = [1, 1, 32], strides = [1, 1, 1]} : vector<8x1x32xf32> to vector<1x1x32xf32>
    %44 = vector.shape_cast %43 : vector<1x1x32xf32> to vector<1x32xf32>
    %45 = vector.shape_cast %44 : vector<1x32xf32> to vector<1x1x32xf32>
    %46 = vector.broadcast %45 : vector<1x1x32xf32> to vector<2x8x32xf32>
    %47 = arith.mulf %42, %46 : vector<2x8x32xf32>
    %48 = vector.extract_strided_slice %41 {offsets = [0, 8, 0], sizes = [2, 8, 32], strides = [1, 1, 1]} : vector<2x64x32xf32> to vector<2x8x32xf32>
    %49 = vector.extract_strided_slice %10 {offsets = [1, 0, 0], sizes = [1, 1, 32], strides = [1, 1, 1]} : vector<8x1x32xf32> to vector<1x1x32xf32>
    %50 = vector.shape_cast %49 : vector<1x1x32xf32> to vector<1x32xf32>
    %51 = vector.shape_cast %50 : vector<1x32xf32> to vector<1x1x32xf32>
    %52 = vector.broadcast %51 : vector<1x1x32xf32> to vector<2x8x32xf32>
    %53 = arith.mulf %48, %52 : vector<2x8x32xf32>
    %54 = arith.addf %47, %53 : vector<2x8x32xf32>
    %55 = vector.extract_strided_slice %41 {offsets = [0, 16, 0], sizes = [2, 8, 32], strides = [1, 1, 1]} : vector<2x64x32xf32> to vector<2x8x32xf32>
    %56 = vector.extract_strided_slice %10 {offsets = [2, 0, 0], sizes = [1, 1, 32], strides = [1, 1, 1]} : vector<8x1x32xf32> to vector<1x1x32xf32>
    %57 = vector.shape_cast %56 : vector<1x1x32xf32> to vector<1x32xf32>
    %58 = vector.shape_cast %57 : vector<1x32xf32> to vector<1x1x32xf32>
    %59 = vector.broadcast %58 : vector<1x1x32xf32> to vector<2x8x32xf32>
    %60 = arith.mulf %55, %59 : vector<2x8x32xf32>
    %61 = arith.addf %54, %60 : vector<2x8x32xf32>
    %62 = vector.extract_strided_slice %41 {offsets = [0, 24, 0], sizes = [2, 8, 32], strides = [1, 1, 1]} : vector<2x64x32xf32> to vector<2x8x32xf32>
    %63 = vector.extract_strided_slice %10 {offsets = [3, 0, 0], sizes = [1, 1, 32], strides = [1, 1, 1]} : vector<8x1x32xf32> to vector<1x1x32xf32>
    %64 = vector.shape_cast %63 : vector<1x1x32xf32> to vector<1x32xf32>
    %65 = vector.shape_cast %64 : vector<1x32xf32> to vector<1x1x32xf32>
    %66 = vector.broadcast %65 : vector<1x1x32xf32> to vector<2x8x32xf32>
    %67 = arith.mulf %62, %66 : vector<2x8x32xf32>
    %68 = arith.addf %61, %67 : vector<2x8x32xf32>
    %69 = vector.extract_strided_slice %41 {offsets = [0, 32, 0], sizes = [2, 8, 32], strides = [1, 1, 1]} : vector<2x64x32xf32> to vector<2x8x32xf32>
    %70 = vector.extract_strided_slice %10 {offsets = [4, 0, 0], sizes = [1, 1, 32], strides = [1, 1, 1]} : vector<8x1x32xf32> to vector<1x1x32xf32>
    %71 = vector.shape_cast %70 : vector<1x1x32xf32> to vector<1x32xf32>
    %72 = vector.shape_cast %71 : vector<1x32xf32> to vector<1x1x32xf32>
    %73 = vector.broadcast %72 : vector<1x1x32xf32> to vector<2x8x32xf32>
    %74 = arith.mulf %69, %73 : vector<2x8x32xf32>
    %75 = arith.addf %68, %74 : vector<2x8x32xf32>
    %76 = vector.extract_strided_slice %41 {offsets = [0, 40, 0], sizes = [2, 8, 32], strides = [1, 1, 1]} : vector<2x64x32xf32> to vector<2x8x32xf32>
    %77 = vector.extract_strided_slice %10 {offsets = [5, 0, 0], sizes = [1, 1, 32], strides = [1, 1, 1]} : vector<8x1x32xf32> to vector<1x1x32xf32>
    %78 = vector.shape_cast %77 : vector<1x1x32xf32> to vector<1x32xf32>
    %79 = vector.shape_cast %78 : vector<1x32xf32> to vector<1x1x32xf32>
    %80 = vector.broadcast %79 : vector<1x1x32xf32> to vector<2x8x32xf32>
    %81 = arith.mulf %76, %80 : vector<2x8x32xf32>
    %82 = arith.addf %75, %81 : vector<2x8x32xf32>
    %83 = vector.extract_strided_slice %41 {offsets = [0, 48, 0], sizes = [2, 8, 32], strides = [1, 1, 1]} : vector<2x64x32xf32> to vector<2x8x32xf32>
    %84 = vector.extract_strided_slice %10 {offsets = [6, 0, 0], sizes = [1, 1, 32], strides = [1, 1, 1]} : vector<8x1x32xf32> to vector<1x1x32xf32>
    %85 = vector.shape_cast %84 : vector<1x1x32xf32> to vector<1x32xf32>
    %86 = vector.shape_cast %85 : vector<1x32xf32> to vector<1x1x32xf32>
    %87 = vector.broadcast %86 : vector<1x1x32xf32> to vector<2x8x32xf32>
    %88 = arith.mulf %83, %87 : vector<2x8x32xf32>
    %89 = arith.addf %82, %88 : vector<2x8x32xf32>
    %90 = vector.extract_strided_slice %41 {offsets = [0, 56, 0], sizes = [2, 8, 32], strides = [1, 1, 1]} : vector<2x64x32xf32> to vector<2x8x32xf32>
    %91 = vector.extract_strided_slice %10 {offsets = [7, 0, 0], sizes = [1, 1, 32], strides = [1, 1, 1]} : vector<8x1x32xf32> to vector<1x1x32xf32>
    %92 = vector.shape_cast %91 : vector<1x1x32xf32> to vector<1x32xf32>
    %93 = vector.shape_cast %92 : vector<1x32xf32> to vector<1x1x32xf32>
    %94 = vector.broadcast %93 : vector<1x1x32xf32> to vector<2x8x32xf32>
    %95 = arith.mulf %90, %94 : vector<2x8x32xf32>
    %96 = arith.addf %89, %95 : vector<2x8x32xf32>
    %97 = vector.shape_cast %96 : vector<2x8x32xf32> to vector<16x32xf32>
    %cst_18 = arith.constant dense<0.000000e+00> : vector<16xf32>
    %98 = vector.multi_reduction <add>, %97, %cst_18 [1] : vector<16x32xf32> to vector<16xf32>
    %99 = vector.shape_cast %98 : vector<16xf32> to vector<16x1xf32>
    %cst_19 = arith.constant 3.200000e+01 : f32
    %100 = vector.broadcast %cst_19 : f32 to vector<16x1xf32>
    %101 = arith.divf %99, %100 : vector<16x1xf32>
    %102 = vector.broadcast %101 : vector<16x1xf32> to vector<16x32xf32>
    %103 = arith.subf %97, %102 : vector<16x32xf32>
    %104 = arith.mulf %103, %103 : vector<16x32xf32>
    %cst_20 = arith.constant dense<0.000000e+00> : vector<16xf32>
    %105 = vector.multi_reduction <add>, %104, %cst_20 [1] : vector<16x32xf32> to vector<16xf32>
    %106 = vector.shape_cast %105 : vector<16xf32> to vector<16x1xf32>
    %cst_21 = arith.constant 3.200000e+01 : f32
    %107 = vector.broadcast %cst_21 : f32 to vector<16x1xf32>
    %108 = arith.divf %106, %107 : vector<16x1xf32>
    %109 = vector.broadcast %101 : vector<16x1xf32> to vector<16x32xf32>
    %110 = arith.subf %97, %109 : vector<16x32xf32>
    %cst_22 = arith.constant 9.99999974E-6 : f32
    %111 = vector.broadcast %cst_22 : f32 to vector<16x1xf32>
    %112 = arith.addf %108, %111 : vector<16x1xf32>
    %113 = math.rsqrt %112 : vector<16x1xf32>
    %114 = vector.broadcast %113 : vector<16x1xf32> to vector<16x32xf32>
    %115 = arith.mulf %110, %114 : vector<16x32xf32>
    %c0_23 = arith.constant 0 : index
    %c0_24 = arith.constant 0 : index
    %116 = vector.load %arg5[%c0_23, %c0_24] : memref<1x32xf32, #tpu.memory_space<vmem>>, vector<1x32xf32>
    %117 = vector.broadcast %116 : vector<1x32xf32> to vector<16x32xf32>
    %118 = arith.mulf %115, %117 : vector<16x32xf32>
    %c0_25 = arith.constant 0 : index
    %c0_26 = arith.constant 0 : index
    %119 = vector.load %arg6[%c0_25, %c0_26] : memref<1x32xf32, #tpu.memory_space<vmem>>, vector<1x32xf32>
    %120 = vector.broadcast %119 : vector<1x32xf32> to vector<16x32xf32>
    %121 = arith.addf %118, %120 : vector<16x32xf32>
    %c0_27 = arith.constant 0 : index
    %c0_28 = arith.constant 0 : index
    %122 = vector.load %arg7[%c0_27, %c0_28] : memref<16x32xf32, #tpu.memory_space<vmem>>, vector<16x32xf32>
    tpu.vector_store %arg7[%c0_27, %c0_28], %121 {strides = array<i32>} : memref<16x32xf32, #tpu.memory_space<vmem>>, vector<16x32xf32>,
    return
  }
}

</mosaic_0001>

<llo_original>
// kernel: tpu_custom_call.1
$region0: #{tpu_custom_call.1}
  #allocation0 [shape = 'u32[]', space=smem, size = 0x4, offset = 0x4, fixed_abs, tag = 'smem constant byte address 0x4 - core index']
  #allocation1 [shape = 'u32[144,128]{1,0:T(1,128)}', space=vmem, size = 0x12000, scoped, tag = 'internal scratch']
  %s0 = inlined_call_operand.vmem [shape: f32[16,32], index: 0, kind: input, shape index: {}]
  %s1 = inlined_call_operand.vmem [shape: bf16[32,96], index: 1, kind: input, shape index: {}]
  %s2 = inlined_call_operand.vmem [shape: f32[8,1,32], index: 2, kind: input, shape index: {}]
  %s3 = inlined_call_operand.vmem [shape: s32[2,1,8], index: 3, kind: input, shape index: {}]
  %s4 = inlined_call_operand.vmem [shape: f32[1,64,8], index: 4, kind: input, shape index: {}]
  %s5 = inlined_call_operand.vmem [shape: f32[1,32], index: 5, kind: input, shape index: {}]
  %s6 = inlined_call_operand.vmem [shape: f32[1,32], index: 6, kind: input, shape index: {}]
  %s7 = inlined_call_operand.hbm [shape: f32[16,32], index: 7, kind: output, shape index: {}]
  %s8 = sld [smem:[#allocation0]]
  $region38: #{tpu_custom_call.1} parent=0
    _
  %s10 = ssub.s32 1, %s8
  %s11 = scalar_select 0, %s10, %s8
  $region1: #{tpu_custom_call.1} parent=0
    #allocation2 [shape = 'u8[8192]{0}', space=vmem, size = 0x2000, scoped, tag = 'output window, operand 0, single buffered']
    #allocation3 [shape = 's32[1]{0}', space=sflag, size = 0x4, scoped, tag = 'scoped memory for tpu_custom_call.1']
    %12 = vsyncpa [#allocation3], 0
    // Predicated region
    $region2: #{tpu_custom_call.1} parent=1 // pred_check
      _
    $region3: #{tpu_custom_call.1} parent=1 // pred_check_branch
      %14 = sbr.rel (0) target = $region5
    $region4: #{tpu_custom_call.1} parent=1 // pred_region
      _
    $region5: #{tpu_custom_call.1} parent=1 // pred_fallthru
      _
    // Predicated region
    $region6: #{tpu_custom_call.1} parent=1 // pred_check
      _
    $region7: #{tpu_custom_call.1} parent=1 // pred_check_branch
      %16 = sbr.rel (0) target = $region9
    $region8: #{tpu_custom_call.1} parent=1 // pred_region
      _
    $region9: #{tpu_custom_call.1} parent=1 // pred_fallthru
      _
    // Predicated region
    $region10: #{tpu_custom_call.1} parent=1 // pred_check
      _
    $region11: #{tpu_custom_call.1} parent=1 // pred_check_branch
      %18 = sbr.rel (0) target = $region13
    $region12: #{tpu_custom_call.1} parent=1 // pred_region
      _
    $region13: #{tpu_custom_call.1} parent=1 // pred_fallthru
      _
    // Predicated region
    $region14: #{tpu_custom_call.1} parent=1 // pred_check
      _
    $region15: #{tpu_custom_call.1} parent=1 // pred_check_branch
      %20 = sbr.rel (0) target = $region17
    $region16: #{tpu_custom_call.1} parent=1 // pred_region
      _
    $region17: #{tpu_custom_call.1} parent=1 // pred_fallthru
      _
    // Predicated region
    $region18: #{tpu_custom_call.1} parent=1 // pred_check
      _
    $region19: #{tpu_custom_call.1} parent=1 // pred_check_branch
      %22 = sbr.rel (0) target = $region21
    $region20: #{tpu_custom_call.1} parent=1 // pred_region
      _
    $region21: #{tpu_custom_call.1} parent=1 // pred_fallthru
      _
    // Predicated region
    $region22: #{tpu_custom_call.1} parent=1 // pred_check
      _
    $region23: #{tpu_custom_call.1} parent=1 // pred_check_branch
      %24 = sbr.rel (0) target = $region25
    $region24: #{tpu_custom_call.1} parent=1 // pred_region
      _
    $region25: #{tpu_custom_call.1} parent=1 // pred_fallthru
      _
    // Predicated region
    $region26: #{tpu_custom_call.1} parent=1 // pred_check
      _
    $region27: #{tpu_custom_call.1} parent=1 // pred_check_branch
      %26 = sbr.rel (0) target = $region29
    $region28: #{tpu_custom_call.1} parent=1 // pred_region
      _
    $region29: #{tpu_custom_call.1} parent=1 // pred_fallthru
      _
    %v28 = vld [vmem:[%s0] sm:$0xff]
    %v29 = vld [vmem:[%s0 + $0x8] sm:$0xff]
    %v30 = vpack.c.bf16 %v29, %v28
    %v31 = vld [vmem:[%s1] sm:$0xf]
    %v32 = vld [vmem:[%s1 + $0x4] sm:$0xf]
    %v33 = vld [vmem:[%s1 + $0x8] sm:$0xf]
    %v34 = vld [vmem:[%s1 + $0xc] sm:$0xf]
    %v39 = vunpack.c.l.b16 %v31
    %v40 = vunpack.c.l.b16 %v32
    %v41 = vunpack.c.l.b16 %v33
    %v42 = vunpack.c.l.b16 %v34
    %v43 = vpack.c.b16 %v40, %v39
    %v44 = vpack.c.b16 %v42, %v41
    %vm47 = vcmask 261120
    %v49 = vsel %vm47, %v30, 0
    %51 = vmatprep.subr.bf16.mxu0 0
    %52 = vmatpush1.bf16.msra.mxu0 %v43
    %53 = vmatprep.subr.bf16.mxu0 0
    %54 = vmatpush1.bf16.msra.mxu0 %v44
    %55 = vmatprep.subr.bf16.mxu0 0
    %56 = vmatpush1.bf16.msra.mxu0 0
    %57 = vmatprep.subr.bf16.mxu0 0
    %58 = vmatpush1.bf16.msra.mxu0 0
    %59 = vmatprep.subr.bf16.mxu0 0
    %60 = vmatpush1.bf16.msra.mxu0 0
    %61 = vmatprep.subr.bf16.mxu0 0
    %62 = vmatpush1.bf16.msra.mxu0 0
    %63 = vmatprep.subr.bf16.mxu0 0
    %64 = vmatpush1.bf16.msra.mxu0 0
    %65 = vmatprep.subr.bf16.mxu0 0
    %66 = vmatpush1.bf16.msra.mxu0 0
    %67 = vmatprep.subr.bf16.mxu0 0
    %68 = vmatpush1.bf16.msra.mxu0 0
    %69 = vmatprep.subr.bf16.mxu0 0
    %70 = vmatpush1.bf16.msra.mxu0 0
    %71 = vmatprep.subr.bf16.mxu0 0
    %72 = vmatpush1.bf16.msra.mxu0 0
    %73 = vmatprep.subr.bf16.mxu0 0
    %74 = vmatpush1.bf16.msra.mxu0 0
    %75 = vmatprep.subr.bf16.mxu0 0
    %76 = vmatpush1.bf16.msra.mxu0 0
    %77 = vmatprep.subr.bf16.mxu0 0
    %78 = vmatpush1.bf16.msra.mxu0 0
    %79 = vmatprep.subr.bf16.mxu0 0
    %80 = vmatpush1.bf16.msra.mxu0 0
    %81 = vmatprep.subr.bf16.mxu0 0
    %82 = vmatpush1.bf16.msra.mxu0 0
    %83 = vmatprep.mubr.bf16.mxu0 0
    %84 = vmatmul.mubr.bf16.gmra.mrb[0].mxu0 %v49
    %v85 = vpop.f32.mrb[0].mxu0
    %v86 = vadd.f32 0.0, %v85
    %v87 = vpop.f32.mrb[0].mxu0
    %v88 = vpop.f32.mrb[0].mxu0
    %v89 = vadd.f32 0.0, %v88
    %v90 = vpop.f32.mrb[0].mxu0
    %91 = vdwg.mxu0
    %v92 = vld [vmem:[%s2] sm:$0x1]
    %v93 = vld [vmem:[%s2 + $0x1] sm:$0x1]
    %v94 = vld [vmem:[%s2 + $0x2] sm:$0x1]
    %v95 = vld [vmem:[%s2 + $0x3] sm:$0x1]
    %v96 = vld [vmem:[%s2 + $0x4] sm:$0x1]
    %v97 = vld [vmem:[%s2 + $0x5] sm:$0x1]
    %v98 = vld [vmem:[%s2 + $0x6] sm:$0x1]
    %v99 = vld [vmem:[%s2 + $0x7] sm:$0x1]
    %v108 = vlaneseq
    %v109 = vshrl.u32 %v108, 7
    %v110 = vsub.s32 0, %v109
    %v111 = vrot.slane %v92, %v110
    %v112 = vlaneseq
    %v113 = vshrl.u32 %v112, 7
    %v114 = vsub.s32 0, %v113
    %v115 = vrot.slane %v93, %v114
    %v116 = vlaneseq
    %v117 = vshrl.u32 %v116, 7
    %v118 = vsub.s32 0, %v117
    %v119 = vrot.slane %v94, %v118
    %v120 = vlaneseq
    %v121 = vshrl.u32 %v120, 7
    %v122 = vsub.s32 0, %v121
    %v123 = vrot.slane %v95, %v122
    %v124 = vlaneseq
    %v125 = vshrl.u32 %v124, 7
    %v126 = vsub.s32 0, %v125
    %v127 = vrot.slane %v96, %v126
    %v128 = vlaneseq
    %v129 = vshrl.u32 %v128, 7
    %v130 = vsub.s32 0, %v129
    %v131 = vrot.slane %v97, %v130
    %v132 = vlaneseq
    %v133 = vshrl.u32 %v132, 7
    %v134 = vsub.s32 0, %v133
    %v135 = vrot.slane %v98, %v134
    %v136 = vlaneseq
    %v137 = vshrl.u32 %v136, 7
    %v138 = vsub.s32 0, %v137
    %v139 = vrot.slane %v99, %v138
    %v148 = vmul.f32 %v86, %v111
    %v149 = vmul.f32 %v86, %v115
    %v150 = vmul.f32 %v86, %v119
    %v151 = vmul.f32 %v86, %v123
    %v152 = vmul.f32 %v86, %v127
    %v153 = vmul.f32 %v86, %v131
    %v154 = vmul.f32 %v86, %v135
    %v155 = vmul.f32 %v86, %v139
    %v156 = vmul.f32 %v89, %v111
    %v157 = vmul.f32 %v89, %v115
    %v158 = vmul.f32 %v89, %v119
    %v159 = vmul.f32 %v89, %v123
    %v160 = vmul.f32 %v89, %v127
    %v161 = vmul.f32 %v89, %v131
    %v162 = vmul.f32 %v89, %v135
    %v163 = vmul.f32 %v89, %v139
    %165 = vrot.lane.b32.xlu0 %v86, 96
    %v166 = vpop.permute.xlu0 %165
    %v168 = vsel %vm47, %v148, 0
    %v171 = vsel %vm47, %v149, 0
    %v174 = vsel %vm47, %v150, 0
    %v177 = vsel %vm47, %v151, 0
    %v180 = vsel %vm47, %v152, 0
    %v183 = vsel %vm47, %v153, 0
    %v186 = vsel %vm47, %v154, 0
    %v189 = vsel %vm47, %v155, 0
    %v191 = vsel %vm47, %v166, 0
    %193 = vmatprep.subr.mxu0 0.0
    %194 = vmatpush1.xpose.msra.mxu0 %v191
    %195 = vmatprep.subr.mxu0 0.0
    %196 = vmatpush1.xpose.msra.mxu0 0.0
    %197 = vmatprep.subr.mxu0 0.0
    %198 = vmatpush1.xpose.msra.mxu0 0.0
    %199 = vmatprep.subr.mxu0 0.0
    %200 = vmatpush1.xpose.msra.mxu0 0.0
    %201 = vmatprep.subr.mxu0 0.0
    %202 = vmatpush1.xpose.msra.mxu0 0.0
    %203 = vmatprep.subr.mxu0 0.0
    %204 = vmatpush1.xpose.msra.mxu0 0.0
    %205 = vmatprep.subr.mxu0 0.0
    %206 = vmatpush1.xpose.msra.mxu0 0.0
    %207 = vmatprep.subr.mxu0 0.0
    %208 = vmatpush1.xpose.msra.mxu0 0.0
    %209 = vmatprep.subr.mxu0 0.0
    %210 = vmatpush1.xpose.msra.mxu0 0.0
    %211 = vmatprep.subr.mxu0 0.0
    %212 = vmatpush1.xpose.msra.mxu0 0.0
    %213 = vmatprep.subr.mxu0 0.0
    %214 = vmatpush1.xpose.msra.mxu0 0.0
    %215 = vmatprep.subr.mxu0 0.0
    %216 = vmatpush1.xpose.msra.mxu0 0.0
    %217 = vmatprep.subr.mxu0 0.0
    %218 = vmatpush1.xpose.msra.mxu0 0.0
    %219 = vmatprep.subr.mxu0 0.0
    %220 = vmatpush1.xpose.msra.mxu0 0.0
    %221 = vmatprep.subr.mxu0 0.0
    %222 = vmatpush1.xpose.msra.mxu0 0.0
    %223 = vmatprep.subr.mxu0 0.0
    %224 = vmatpush1.xpose.msra.mxu0 0.0
    %225 = vmatprep.subr.mxu0 0.0
    %226 = vmatpush1.xpose.msra.mxu0 0.0
    %227 = vmatprep.subr.mxu0 0.0
    %228 = vmatpush1.xpose.msra.mxu0 0.0
    %229 = vmatprep.subr.mxu0 0.0
    %230 = vmatpush1.xpose.msra.mxu0 0.0
    %231 = vmatprep.subr.mxu0 0.0
    %232 = vmatpush1.xpose.msra.mxu0 0.0
    %233 = vmatprep.subr.mxu0 0.0
    %234 = vmatpush1.xpose.msra.mxu0 0.0
    %235 = vmatprep.subr.mxu0 0.0
    %236 = vmatpush1.xpose.msra.mxu0 0.0
    %237 = vmatprep.subr.mxu0 0.0
    %238 = vmatpush1.xpose.msra.mxu0 0.0
    %239 = vmatprep.subr.mxu0 0.0
    %240 = vmatpush1.xpose.msra.mxu0 0.0
    %241 = vmatprep.subr.mxu0 0.0
    %242 = vmatpush1.xpose.msra.mxu0 0.0
    %243 = vmatprep.subr.mxu0 0.0
    %244 = vmatpush1.xpose.msra.mxu0 0.0
    %245 = vmatprep.subr.mxu0 0.0
    %246 = vmatpush1.xpose.msra.mxu0 0.0
    %247 = vmatprep.subr.mxu0 0.0
    %248 = vmatpush1.xpose.msra.mxu0 0.0
    %249 = vmatprep.subr.mxu0 0.0
    %250 = vmatpush1.xpose.msra.mxu0 0.0
    %251 = vmatprep.subr.mxu0 0.0
    %252 = vmatpush1.xpose.msra.mxu0 0.0
    %253 = vmatprep.subr.mxu0 0.0
    %254 = vmatpush1.xpose.msra.mxu0 0.0
    %255 = vmatprep.subr.mxu0 0.0
    %256 = vmatpush1.xpose.msra.mxu0 0.0
    %257 = vmatprep.mubr.f32.mxu0 0.0
    %258 = vmatmul.mubr.f32.gmra.mrb[0].mxu0 %v168
    %v259 = vpop.f32.mrb[0].mxu0
    %v260 = vadd.f32 0.0, %v259
    %v261 = vpop.f32.mrb[0].mxu0
    %262 = vmatprep.mubr.f32.mxu0 0.0
    %263 = vmatmul.mubr.f32.gmra.mrb[0].mxu0 %v171
    %v264 = vpop.f32.mrb[0].mxu0
    %v265 = vadd.f32 0.0, %v264
    %v266 = vpop.f32.mrb[0].mxu0
    %267 = vmatprep.mubr.f32.mxu0 0.0
    %268 = vmatmul.mubr.f32.gmra.mrb[0].mxu0 %v174
    %v269 = vpop.f32.mrb[0].mxu0
    %v270 = vadd.f32 0.0, %v269
    %v271 = vpop.f32.mrb[0].mxu0
    %272 = vmatprep.mubr.f32.mxu0 0.0
    %273 = vmatmul.mubr.f32.gmra.mrb[0].mxu0 %v177
    %v274 = vpop.f32.mrb[0].mxu0
    %v275 = vadd.f32 0.0, %v274
    %v276 = vpop.f32.mrb[0].mxu0
    %277 = vmatprep.mubr.f32.mxu0 0.0
    %278 = vmatmul.mubr.f32.gmra.mrb[0].mxu0 %v180
    %v279 = vpop.f32.mrb[0].mxu0
    %v280 = vadd.f32 0.0, %v279
    %v281 = vpop.f32.mrb[0].mxu0
    %282 = vmatprep.mubr.f32.mxu0 0.0
    %283 = vmatmul.mubr.f32.gmra.mrb[0].mxu0 %v183
    %v284 = vpop.f32.mrb[0].mxu0
    %v285 = vadd.f32 0.0, %v284
    %v286 = vpop.f32.mrb[0].mxu0
    %287 = vmatprep.mubr.f32.mxu0 0.0
    %288 = vmatmul.mubr.f32.gmra.mrb[0].mxu0 %v186
    %v289 = vpop.f32.mrb[0].mxu0
    %v290 = vadd.f32 0.0, %v289
    %v291 = vpop.f32.mrb[0].mxu0
    %292 = vmatprep.mubr.f32.mxu0 0.0
    %293 = vmatmul.mubr.f32.gmra.mrb[0].mxu0 %v189
    %v294 = vpop.f32.mrb[0].mxu0
    %v295 = vadd.f32 0.0, %v294
    %v296 = vpop.f32.mrb[0].mxu0
    %297 = vdwg.mxu0
    %299 = vrot.lane.b32.xlu0 %v89, 96
    %v300 = vpop.permute.xlu0 %299
    %v302 = vsel %vm47, %v156, 0
    %v305 = vsel %vm47, %v157, 0
    %v308 = vsel %vm47, %v158, 0
    %v311 = vsel %vm47, %v159, 0
    %v314 = vsel %vm47, %v160, 0
    %v317 = vsel %vm47, %v161, 0
    %v320 = vsel %vm47, %v162, 0
    %v323 = vsel %vm47, %v163, 0
    %v325 = vsel %vm47, %v300, 0
    %327 = vmatprep.subr.mxu0 0.0
    %328 = vmatpush1.xpose.msra.mxu0 %v325
    %329 = vmatprep.subr.mxu0 0.0
    %330 = vmatpush1.xpose.msra.mxu0 0.0
    %331 = vmatprep.subr.mxu0 0.0
    %332 = vmatpush1.xpose.msra.mxu0 0.0
    %333 = vmatprep.subr.mxu0 0.0
    %334 = vmatpush1.xpose.msra.mxu0 0.0
    %335 = vmatprep.subr.mxu0 0.0
    %336 = vmatpush1.xpose.msra.mxu0 0.0
    %337 = vmatprep.subr.mxu0 0.0
    %338 = vmatpush1.xpose.msra.mxu0 0.0
    %339 = vmatprep.subr.mxu0 0.0
    %340 = vmatpush1.xpose.msra.mxu0 0.0
    %341 = vmatprep.subr.mxu0 0.0
    %342 = vmatpush1.xpose.msra.mxu0 0.0
    %343 = vmatprep.subr.mxu0 0.0
    %344 = vmatpush1.xpose.msra.mxu0 0.0
    %345 = vmatprep.subr.mxu0 0.0
    %346 = vmatpush1.xpose.msra.mxu0 0.0
    %347 = vmatprep.subr.mxu0 0.0
    %348 = vmatpush1.xpose.msra.mxu0 0.0
    %349 = vmatprep.subr.mxu0 0.0
    %350 = vmatpush1.xpose.msra.mxu0 0.0
    %351 = vmatprep.subr.mxu0 0.0
    %352 = vmatpush1.xpose.msra.mxu0 0.0
    %353 = vmatprep.subr.mxu0 0.0
    %354 = vmatpush1.xpose.msra.mxu0 0.0
    %355 = vmatprep.subr.mxu0 0.0
    %356 = vmatpush1.xpose.msra.mxu0 0.0
    %357 = vmatprep.subr.mxu0 0.0
    %358 = vmatpush1.xpose.msra.mxu0 0.0
    %359 = vmatprep.subr.mxu0 0.0
    %360 = vmatpush1.xpose.msra.mxu0 0.0
    %361 = vmatprep.subr.mxu0 0.0
    %362 = vmatpush1.xpose.msra.mxu0 0.0
    %363 = vmatprep.subr.mxu0 0.0
    %364 = vmatpush1.xpose.msra.mxu0 0.0
    %365 = vmatprep.subr.mxu0 0.0
    %366 = vmatpush1.xpose.msra.mxu0 0.0
    %367 = vmatprep.subr.mxu0 0.0
    %368 = vmatpush1.xpose.msra.mxu0 0.0
    %369 = vmatprep.subr.mxu0 0.0
    %370 = vmatpush1.xpose.msra.mxu0 0.0
    %371 = vmatprep.subr.mxu0 0.0
    %372 = vmatpush1.xpose.msra.mxu0 0.0
    %373 = vmatprep.subr.mxu0 0.0
    %374 = vmatpush1.xpose.msra.mxu0 0.0
    %375 = vmatprep.subr.mxu0 0.0
    %376 = vmatpush1.xpose.msra.mxu0 0.0
    %377 = vmatprep.subr.mxu0 0.0
    %378 = vmatpush1.xpose.msra.mxu0 0.0
    %379 = vmatprep.subr.mxu0 0.0
    %380 = vmatpush1.xpose.msra.mxu0 0.0
    %381 = vmatprep.subr.mxu0 0.0
    %382 = vmatpush1.xpose.msra.mxu0 0.0
    %383 = vmatprep.subr.mxu0 0.0
    %384 = vmatpush1.xpose.msra.mxu0 0.0
    %385 = vmatprep.subr.mxu0 0.0
    %386 = vmatpush1.xpose.msra.mxu0 0.0
    %387 = vmatprep.subr.mxu0 0.0
    %388 = vmatpush1.xpose.msra.mxu0 0.0
    %389 = vmatprep.subr.mxu0 0.0
    %390 = vmatpush1.xpose.msra.mxu0 0.0
    %391 = vmatprep.mubr.f32.mxu0 0.0
    %392 = vmatmul.mubr.f32.gmra.mrb[0].mxu0 %v302
    %v393 = vpop.f32.mrb[0].mxu0
    %v394 = vadd.f32 0.0, %v393
    %v395 = vpop.f32.mrb[0].mxu0
    %396 = vmatprep.mubr.f32.mxu0 0.0
    %397 = vmatmul.mubr.f32.gmra.mrb[0].mxu0 %v305
    %v398 = vpop.f32.mrb[0].mxu0
    %v399 = vadd.f32 0.0, %v398
    %v400 = vpop.f32.mrb[0].mxu0
    %401 = vmatprep.mubr.f32.mxu0 0.0
    %402 = vmatmul.mubr.f32.gmra.mrb[0].mxu0 %v308
    %v403 = vpop.f32.mrb[0].mxu0
    %v404 = vadd.f32 0.0, %v403
    %v405 = vpop.f32.mrb[0].mxu0
    %406 = vmatprep.mubr.f32.mxu0 0.0
    %407 = vmatmul.mubr.f32.gmra.mrb[0].mxu0 %v311
    %v408 = vpop.f32.mrb[0].mxu0
    %v409 = vadd.f32 0.0, %v408
    %v410 = vpop.f32.mrb[0].mxu0
    %411 = vmatprep.mubr.f32.mxu0 0.0
    %412 = vmatmul.mubr.f32.gmra.mrb[0].mxu0 %v314
    %v413 = vpop.f32.mrb[0].mxu0
    %v414 = vadd.f32 0.0, %v413
    %v415 = vpop.f32.mrb[0].mxu0
    %416 = vmatprep.mubr.f32.mxu0 0.0
    %417 = vmatmul.mubr.f32.gmra.mrb[0].mxu0 %v317
    %v418 = vpop.f32.mrb[0].mxu0
    %v419 = vadd.f32 0.0, %v418
    %v420 = vpop.f32.mrb[0].mxu0
    %421 = vmatprep.mubr.f32.mxu0 0.0
    %422 = vmatmul.mubr.f32.gmra.mrb[0].mxu0 %v320
    %v423 = vpop.f32.mrb[0].mxu0
    %v424 = vadd.f32 0.0, %v423
    %v425 = vpop.f32.mrb[0].mxu0
    %426 = vmatprep.mubr.f32.mxu0 0.0
    %427 = vmatmul.mubr.f32.gmra.mrb[0].mxu0 %v323
    %v428 = vpop.f32.mrb[0].mxu0
    %v429 = vadd.f32 0.0, %v428
    %v430 = vpop.f32.mrb[0].mxu0
    %431 = vdwg.mxu0
    %v432 = vmul.f32 %v260, 0.17677669
    %v433 = vmul.f32 %v265, 0.17677669
    %v434 = vmul.f32 %v270, 0.17677669
    %v435 = vmul.f32 %v275, 0.17677669
    %v436 = vmul.f32 %v280, 0.17677669
    %v437 = vmul.f32 %v285, 0.17677669
    %v438 = vmul.f32 %v290, 0.17677669
    %v439 = vmul.f32 %v295, 0.17677669
    %v440 = vmul.f32 %v394, 0.17677669
    %v441 = vmul.f32 %v399, 0.17677669
    %v442 = vmul.f32 %v404, 0.17677669
    %v443 = vmul.f32 %v409, 0.17677669
    %v444 = vmul.f32 %v414, 0.17677669
    %v445 = vmul.f32 %v419, 0.17677669
    %v446 = vmul.f32 %v424, 0.17677669
    %v447 = vmul.f32 %v429, 0.17677669
    %v448 = vld [vmem:[%s3] sm:$0x1]
    %v449 = vld [vmem:[%s3 + $0x1] sm:$0x1]
    %vm450 = vcmp.eq.s32.totalorder %v448, 0
    %vm451 = vcmp.eq.s32.totalorder %v449, 0
    %v452 = vsel %vm450, 1, 0
    %v453 = vsel %vm451, 1, 0
    %v454 = vlaneseq
    %v455 = vshrl.u32 %v454, 7
    %v456 = vsub.s32 0, %v455
    %v457 = vrot.slane %v452, %v456
    %v458 = vlaneseq
    %v459 = vshrl.u32 %v458, 7
    %v460 = vsub.s32 0, %v459
    %v461 = vrot.slane %v453, %v460
    %vm462 = vcmp.eq.s32.totalorder %v457, 1
    %vm463 = vcmp.eq.s32.totalorder %v461, 1
    %v464 = vsel %vm462, -10000.0, %v432
    %v465 = vsel %vm462, -10000.0, %v433
    %v466 = vsel %vm462, -10000.0, %v434
    %v467 = vsel %vm462, -10000.0, %v435
    %v468 = vsel %vm462, -10000.0, %v436
    %v469 = vsel %vm462, -10000.0, %v437
    %v470 = vsel %vm462, -10000.0, %v438
    %v471 = vsel %vm462, -10000.0, %v439
    %v472 = vsel %vm463, -10000.0, %v440
    %v473 = vsel %vm463, -10000.0, %v441
    %v474 = vsel %vm463, -10000.0, %v442
    %v475 = vsel %vm463, -10000.0, %v443
    %v476 = vsel %vm463, -10000.0, %v444
    %v477 = vsel %vm463, -10000.0, %v445
    %v478 = vsel %vm463, -10000.0, %v446
    %v479 = vsel %vm463, -10000.0, %v447
    %vm480 = vcmask 64512
    %v481 = vsel %vm480, %v464, -inf
    %482 = vmax.xlane.f32.xlu0 %v481
    %v483 = vpop.xlane.xlu0 %482
    %v484 = vsel %vm480, %v465, -inf
    %485 = vmax.xlane.f32.xlu0 %v484
    %v486 = vpop.xlane.xlu0 %485
    %v487 = vsel %vm480, %v466, -inf
    %488 = vmax.xlane.f32.xlu0 %v487
    %v489 = vpop.xlane.xlu0 %488
    %v490 = vsel %vm480, %v467, -inf
    %491 = vmax.xlane.f32.xlu0 %v490
    %v492 = vpop.xlane.xlu0 %491
    %v493 = vsel %vm480, %v468, -inf
    %494 = vmax.xlane.f32.xlu0 %v493
    %v495 = vpop.xlane.xlu0 %494
    %v496 = vsel %vm480, %v469, -inf
    %497 = vmax.xlane.f32.xlu0 %v496
    %v498 = vpop.xlane.xlu0 %497
    %v499 = vsel %vm480, %v470, -inf
    %500 = vmax.xlane.f32.xlu0 %v499
    %v501 = vpop.xlane.xlu0 %500
    %v502 = vsel %vm480, %v471, -inf
    %503 = vmax.xlane.f32.xlu0 %v502
    %v504 = vpop.xlane.xlu0 %503
    %v505 = vsel %vm480, %v472, -inf
    %506 = vmax.xlane.f32.xlu0 %v505
    %v507 = vpop.xlane.xlu0 %506
    %v508 = vsel %vm480, %v473, -inf
    %509 = vmax.xlane.f32.xlu0 %v508
    %v510 = vpop.xlane.xlu0 %509
    %v511 = vsel %vm480, %v474, -inf
    %512 = vmax.xlane.f32.xlu0 %v511
    %v513 = vpop.xlane.xlu0 %512
    %v514 = vsel %vm480, %v475, -inf
    %515 = vmax.xlane.f32.xlu0 %v514
    %v516 = vpop.xlane.xlu0 %515
    %v517 = vsel %vm480, %v476, -inf
    %518 = vmax.xlane.f32.xlu0 %v517
    %v519 = vpop.xlane.xlu0 %518
    %v520 = vsel %vm480, %v477, -inf
    %521 = vmax.xlane.f32.xlu0 %v520
    %v522 = vpop.xlane.xlu0 %521
    %v523 = vsel %vm480, %v478, -inf
    %524 = vmax.xlane.f32.xlu0 %v523
    %v525 = vpop.xlane.xlu0 %524
    %v526 = vsel %vm480, %v479, -inf
    %527 = vmax.xlane.f32.xlu0 %v526
    %v528 = vpop.xlane.xlu0 %527
    %v529 = vsub.f32 %v464, %v483
    %v530 = vsub.f32 %v465, %v486
    %v531 = vsub.f32 %v466, %v489
    %v532 = vsub.f32 %v467, %v492
    %v533 = vsub.f32 %v468, %v495
    %v534 = vsub.f32 %v469, %v498
    %v535 = vsub.f32 %v470, %v501
    %v536 = vsub.f32 %v471, %v504
    %v537 = vsub.f32 %v472, %v507
    %v538 = vsub.f32 %v473, %v510
    %v539 = vsub.f32 %v474, %v513
    %v540 = vsub.f32 %v475, %v516
    %v541 = vsub.f32 %v476, %v519
    %v542 = vsub.f32 %v477, %v522
    %v543 = vsub.f32 %v478, %v525
    %v544 = vsub.f32 %v479, %v528
    %v545 = vmul.f32 %v529, 1.442695
    %v546 = vpow.pop %v545
    %v547 = vmul.f32 %v530, 1.442695
    %v548 = vpow.pop %v547
    %v549 = vmul.f32 %v531, 1.442695
    %v550 = vpow.pop %v549
    %v551 = vmul.f32 %v532, 1.442695
    %v552 = vpow.pop %v551
    %v553 = vmul.f32 %v533, 1.442695
    %v554 = vpow.pop %v553
    %v555 = vmul.f32 %v534, 1.442695
    %v556 = vpow.pop %v555
    %v557 = vmul.f32 %v535, 1.442695
    %v558 = vpow.pop %v557
    %v559 = vmul.f32 %v536, 1.442695
    %v560 = vpow.pop %v559
    %v561 = vmul.f32 %v537, 1.442695
    %v562 = vpow.pop %v561
    %v563 = vmul.f32 %v538, 1.442695
    %v564 = vpow.pop %v563
    %v565 = vmul.f32 %v539, 1.442695
    %v566 = vpow.pop %v565
    %v567 = vmul.f32 %v540, 1.442695
    %v568 = vpow.pop %v567
    %v569 = vmul.f32 %v541, 1.442695
    %v570 = vpow.pop %v569
    %v571 = vmul.f32 %v542, 1.442695
    %v572 = vpow.pop %v571
    %v573 = vmul.f32 %v543, 1.442695
    %v574 = vpow.pop %v573
    %v575 = vmul.f32 %v544, 1.442695
    %v576 = vpow.pop %v575
    %v577 = vsel %vm480, %v546, 0.0
    %578 = vadd.xlane.f32.xlu0 %v577
    %v579 = vpop.xlane.xlu0 %578
    %v580 = vsel %vm480, %v548, 0.0
    %581 = vadd.xlane.f32.xlu0 %v580
    %v582 = vpop.xlane.xlu0 %581
    %v583 = vsel %vm480, %v550, 0.0
    %584 = vadd.xlane.f32.xlu0 %v583
    %v585 = vpop.xlane.xlu0 %584
    %v586 = vsel %vm480, %v552, 0.0
    %587 = vadd.xlane.f32.xlu0 %v586
    %v588 = vpop.xlane.xlu0 %587
    %v589 = vsel %vm480, %v554, 0.0
    %590 = vadd.xlane.f32.xlu0 %v589
    %v591 = vpop.xlane.xlu0 %590
    %v592 = vsel %vm480, %v556, 0.0
    %593 = vadd.xlane.f32.xlu0 %v592
    %v594 = vpop.xlane.xlu0 %593
    %v595 = vsel %vm480, %v558, 0.0
    %596 = vadd.xlane.f32.xlu0 %v595
    %v597 = vpop.xlane.xlu0 %596
    %v598 = vsel %vm480, %v560, 0.0
    %599 = vadd.xlane.f32.xlu0 %v598
    %v600 = vpop.xlane.xlu0 %599
    %v601 = vsel %vm480, %v562, 0.0
    %602 = vadd.xlane.f32.xlu0 %v601
    %v603 = vpop.xlane.xlu0 %602
    %v604 = vsel %vm480, %v564, 0.0
    %605 = vadd.xlane.f32.xlu0 %v604
    %v606 = vpop.xlane.xlu0 %605
    %v607 = vsel %vm480, %v566, 0.0
    %608 = vadd.xlane.f32.xlu0 %v607
    %v609 = vpop.xlane.xlu0 %608
    %v610 = vsel %vm480, %v568, 0.0
    %611 = vadd.xlane.f32.xlu0 %v610
    %v612 = vpop.xlane.xlu0 %611
    %v613 = vsel %vm480, %v570, 0.0
    %614 = vadd.xlane.f32.xlu0 %v613
    %v615 = vpop.xlane.xlu0 %614
    %v616 = vsel %vm480, %v572, 0.0
    %617 = vadd.xlane.f32.xlu0 %v616
    %v618 = vpop.xlane.xlu0 %617
    %v619 = vsel %vm480, %v574, 0.0
    %620 = vadd.xlane.f32.xlu0 %v619
    %v621 = vpop.xlane.xlu0 %620
    %v622 = vsel %vm480, %v576, 0.0
    %623 = vadd.xlane.f32.xlu0 %v622
    %v624 = vpop.xlane.xlu0 %623
    %v625 = vrcp.pop %v579
    %v626 = vmul.f32 %v546, %v625
    %v627 = vrcp.pop %v582
    %v628 = vmul.f32 %v548, %v627
    %v629 = vrcp.pop %v585
    %v630 = vmul.f32 %v550, %v629
    %v631 = vrcp.pop %v588
    %v632 = vmul.f32 %v552, %v631
    %v633 = vrcp.pop %v591
    %v634 = vmul.f32 %v554, %v633
    %v635 = vrcp.pop %v594
    %v636 = vmul.f32 %v556, %v635
    %v637 = vrcp.pop %v597
    %v638 = vmul.f32 %v558, %v637
    %v639 = vrcp.pop %v600
    %v640 = vmul.f32 %v560, %v639
    %v641 = vrcp.pop %v603
    %v642 = vmul.f32 %v562, %v641
    %v643 = vrcp.pop %v606
    %v644 = vmul.f32 %v564, %v643
    %v645 = vrcp.pop %v609
    %v646 = vmul.f32 %v566, %v645
    %v647 = vrcp.pop %v612
    %v648 = vmul.f32 %v568, %v647
    %v649 = vrcp.pop %v615
    %v650 = vmul.f32 %v570, %v649
    %v651 = vrcp.pop %v618
    %v652 = vmul.f32 %v572, %v651
    %v653 = vrcp.pop %v621
    %v654 = vmul.f32 %v574, %v653
    %v655 = vrcp.pop %v624
    %v656 = vmul.f32 %v576, %v655
    %v657 = vld [vmem:[%s4] sm:$0xff]
    %v658 = vld [vmem:[%s4 + $0x8] sm:$0xff]
    %v659 = vld [vmem:[%s4 + $0x10] sm:$0xff]
    %v660 = vld [vmem:[%s4 + $0x18] sm:$0xff]
    %v661 = vld [vmem:[%s4 + $0x20] sm:$0xff]
    %v662 = vld [vmem:[%s4 + $0x28] sm:$0xff]
    %v663 = vld [vmem:[%s4 + $0x30] sm:$0xff]
    %v664 = vld [vmem:[%s4 + $0x38] sm:$0xff]
    %v665 = vadd.f32 %v626, %v657
    %v666 = vadd.f32 %v628, %v658
    %v667 = vadd.f32 %v630, %v659
    %v668 = vadd.f32 %v632, %v660
    %v669 = vadd.f32 %v634, %v661
    %v670 = vadd.f32 %v636, %v662
    %v671 = vadd.f32 %v638, %v663
    %v672 = vadd.f32 %v640, %v664
    %v673 = vadd.f32 %v642, %v657
    %v674 = vadd.f32 %v644, %v658
    %v675 = vadd.f32 %v646, %v659
    %v676 = vadd.f32 %v648, %v660
    %v677 = vadd.f32 %v650, %v661
    %v678 = vadd.f32 %v652, %v662
    %v679 = vadd.f32 %v654, %v663
    %v680 = vadd.f32 %v656, %v664
    %v681 = vpack.c.bf16 %v666, %v665
    %v682 = vpack.c.bf16 %v668, %v667
    %v683 = vpack.c.bf16 %v670, %v669
    %v684 = vpack.c.bf16 %v672, %v671
    %v685 = vpack.c.bf16 %v674, %v673
    %v686 = vpack.c.bf16 %v676, %v675
    %v687 = vpack.c.bf16 %v678, %v677
    %v688 = vpack.c.bf16 %v680, %v679
    %v689 = vpack.c.bf16 %v86, %v86
    %v690 = vpack.c.bf16 %v89, %v89
    %692 = vrot.lane.b32.xlu0 %v689, 64
    %v693 = vpop.permute.xlu0 %692
    %v695 = vsel %vm480, %v681, 0
    %v698 = vsel %vm480, %v682, 0
    %v701 = vsel %vm480, %v683, 0
    %v704 = vsel %vm480, %v684, 0
    %vm706 = vcmask 1043456
    %v708 = vsel %vm706, %v693, 0
    %710 = vmatprep.subr.bf16.mxu0 0
    %711 = vmatpush1.bf16.msra.mxu0 %v708
    %712 = vmatprep.subr.bf16.mxu0 0
    %713 = vmatpush1.bf16.msra.mxu0 0
    %714 = vmatprep.subr.bf16.mxu0 0
    %715 = vmatpush1.bf16.msra.mxu0 0
    %716 = vmatprep.subr.bf16.mxu0 0
    %717 = vmatpush1.bf16.msra.mxu0 0
    %718 = vmatprep.subr.bf16.mxu0 0
    %719 = vmatpush1.bf16.msra.mxu0 0
    %720 = vmatprep.subr.bf16.mxu0 0
    %721 = vmatpush1.bf16.msra.mxu0 0
    %722 = vmatprep.subr.bf16.mxu0 0
    %723 = vmatpush1.bf16.msra.mxu0 0
    %724 = vmatprep.subr.bf16.mxu0 0
    %725 = vmatpush1.bf16.msra.mxu0 0
    %726 = vmatprep.subr.bf16.mxu0 0
    %727 = vmatpush1.bf16.msra.mxu0 0
    %728 = vmatprep.subr.bf16.mxu0 0
    %729 = vmatpush1.bf16.msra.mxu0 0
    %730 = vmatprep.subr.bf16.mxu0 0
    %731 = vmatpush1.bf16.msra.mxu0 0
    %732 = vmatprep.subr.bf16.mxu0 0
    %733 = vmatpush1.bf16.msra.mxu0 0
    %734 = vmatprep.subr.bf16.mxu0 0
    %735 = vmatpush1.bf16.msra.mxu0 0
    %736 = vmatprep.subr.bf16.mxu0 0
    %737 = vmatpush1.bf16.msra.mxu0 0
    %738 = vmatprep.subr.bf16.mxu0 0
    %739 = vmatpush1.bf16.msra.mxu0 0
    %740 = vmatprep.subr.bf16.mxu0 0
    %741 = vmatpush1.bf16.msra.mxu0 0
    %742 = vmatprep.mubr.bf16.mxu0 0
    %743 = vmatmul.mubr.bf16.gmra.mrb[0].mxu0 %v695
    %v744 = vpop.f32.mrb[0].mxu0
    %v745 = vadd.f32 0.0, %v744
    %v746 = vpop.f32.mrb[0].mxu0
    %v747 = vpop.f32.mrb[0].mxu0
    %v748 = vadd.f32 0.0, %v747
    %v749 = vpop.f32.mrb[0].mxu0
    %750 = vmatprep.mubr.bf16.mxu0 0
    %751 = vmatmul.mubr.bf16.gmra.mrb[0].mxu0 %v698
    %v752 = vpop.f32.mrb[0].mxu0
    %v753 = vadd.f32 0.0, %v752
    %v754 = vpop.f32.mrb[0].mxu0
    %v755 = vpop.f32.mrb[0].mxu0
    %v756 = vadd.f32 0.0, %v755
    %v757 = vpop.f32.mrb[0].mxu0
    %758 = vmatprep.mubr.bf16.mxu0 0
    %759 = vmatmul.mubr.bf16.gmra.mrb[0].mxu0 %v701
    %v760 = vpop.f32.mrb[0].mxu0
    %v761 = vadd.f32 0.0, %v760
    %v762 = vpop.f32.mrb[0].mxu0
    %v763 = vpop.f32.mrb[0].mxu0
    %v764 = vadd.f32 0.0, %v763
    %v765 = vpop.f32.mrb[0].mxu0
    %766 = vmatprep.mubr.bf16.mxu0 0
    %767 = vmatmul.mubr.bf16.gmra.mrb[0].mxu0 %v704
    %v768 = vpop.f32.mrb[0].mxu0
    %v769 = vadd.f32 0.0, %v768
    %v770 = vpop.f32.mrb[0].mxu0
    %v771 = vpop.f32.mrb[0].mxu0
    %v772 = vadd.f32 0.0, %v771
    %v773 = vpop.f32.mrb[0].mxu0
    %774 = vdwg.mxu0
    %776 = vrot.lane.b32.xlu0 %v690, 64
    %v777 = vpop.permute.xlu0 %776
    %v779 = vsel %vm480, %v685, 0
    %v782 = vsel %vm480, %v686, 0
    %v785 = vsel %vm480, %v687, 0
    %v788 = vsel %vm480, %v688, 0
    %v791 = vsel %vm706, %v777, 0
    %793 = vmatprep.subr.bf16.mxu0 0
    %794 = vmatpush1.bf16.msra.mxu0 %v791
    %795 = vmatprep.subr.bf16.mxu0 0
    %796 = vmatpush1.bf16.msra.mxu0 0
    %797 = vmatprep.subr.bf16.mxu0 0
    %798 = vmatpush1.bf16.msra.mxu0 0
    %799 = vmatprep.subr.bf16.mxu0 0
    %800 = vmatpush1.bf16.msra.mxu0 0
    %801 = vmatprep.subr.bf16.mxu0 0
    %802 = vmatpush1.bf16.msra.mxu0 0
    %803 = vmatprep.subr.bf16.mxu0 0
    %804 = vmatpush1.bf16.msra.mxu0 0
    %805 = vmatprep.subr.bf16.mxu0 0
    %806 = vmatpush1.bf16.msra.mxu0 0
    %807 = vmatprep.subr.bf16.mxu0 0
    %808 = vmatpush1.bf16.msra.mxu0 0
    %809 = vmatprep.subr.bf16.mxu0 0
    %810 = vmatpush1.bf16.msra.mxu0 0
    %811 = vmatprep.subr.bf16.mxu0 0
    %812 = vmatpush1.bf16.msra.mxu0 0
    %813 = vmatprep.subr.bf16.mxu0 0
    %814 = vmatpush1.bf16.msra.mxu0 0
    %815 = vmatprep.subr.bf16.mxu0 0
    %816 = vmatpush1.bf16.msra.mxu0 0
    %817 = vmatprep.subr.bf16.mxu0 0
    %818 = vmatpush1.bf16.msra.mxu0 0
    %819 = vmatprep.subr.bf16.mxu0 0
    %820 = vmatpush1.bf16.msra.mxu0 0
    %821 = vmatprep.subr.bf16.mxu0 0
    %822 = vmatpush1.bf16.msra.mxu0 0
    %823 = vmatprep.subr.bf16.mxu0 0
    %824 = vmatpush1.bf16.msra.mxu0 0
    %825 = vmatprep.mubr.bf16.mxu0 0
    %826 = vmatmul.mubr.bf16.gmra.mrb[0].mxu0 %v779
    %v827 = vpop.f32.mrb[0].mxu0
    %v828 = vadd.f32 0.0, %v827
    %v829 = vpop.f32.mrb[0].mxu0
    %v830 = vpop.f32.mrb[0].mxu0
    %v831 = vadd.f32 0.0, %v830
    %v832 = vpop.f32.mrb[0].mxu0
    %833 = vmatprep.mubr.bf16.mxu0 0
    %834 = vmatmul.mubr.bf16.gmra.mrb[0].mxu0 %v782
    %v835 = vpop.f32.mrb[0].mxu0
    %v836 = vadd.f32 0.0, %v835
    %v837 = vpop.f32.mrb[0].mxu0
    %v838 = vpop.f32.mrb[0].mxu0
    %v839 = vadd.f32 0.0, %v838
    %v840 = vpop.f32.mrb[0].mxu0
    %841 = vmatprep.mubr.bf16.mxu0 0
    %842 = vmatmul.mubr.bf16.gmra.mrb[0].mxu0 %v785
    %v843 = vpop.f32.mrb[0].mxu0
    %v844 = vadd.f32 0.0, %v843
    %v845 = vpop.f32.mrb[0].mxu0
    %v846 = vpop.f32.mrb[0].mxu0
    %v847 = vadd.f32 0.0, %v846
    %v848 = vpop.f32.mrb[0].mxu0
    %849 = vmatprep.mubr.bf16.mxu0 0
    %850 = vmatmul.mubr.bf16.gmra.mrb[0].mxu0 %v788
    %v851 = vpop.f32.mrb[0].mxu0
    %v852 = vadd.f32 0.0, %v851
    %v853 = vpop.f32.mrb[0].mxu0
    %v854 = vpop.f32.mrb[0].mxu0
    %v855 = vadd.f32 0.0, %v854
    %v856 = vpop.f32.mrb[0].mxu0
    %857 = vdwg.mxu0
    %v858 = vmul.f32 %v745, %v111
    %v859 = vmul.f32 %v828, %v111
    %v860 = vmul.f32 %v748, %v115
    %v861 = vmul.f32 %v831, %v115
    %v862 = vadd.f32 %v858, %v860
    %v863 = vadd.f32 %v859, %v861
    %v864 = vmul.f32 %v753, %v119
    %v865 = vmul.f32 %v836, %v119
    %v866 = vadd.f32 %v862, %v864
    %v867 = vadd.f32 %v863, %v865
    %v868 = vmul.f32 %v756, %v123
    %v869 = vmul.f32 %v839, %v123
    %v870 = vadd.f32 %v866, %v868
    %v871 = vadd.f32 %v867, %v869
    %v872 = vmul.f32 %v761, %v127
    %v873 = vmul.f32 %v844, %v127
    %v874 = vadd.f32 %v870, %v872
    %v875 = vadd.f32 %v871, %v873
    %v876 = vmul.f32 %v764, %v131
    %v877 = vmul.f32 %v847, %v131
    %v878 = vadd.f32 %v874, %v876
    %v879 = vadd.f32 %v875, %v877
    %v880 = vmul.f32 %v769, %v135
    %v881 = vmul.f32 %v852, %v135
    %v882 = vadd.f32 %v878, %v880
    %v883 = vadd.f32 %v879, %v881
    %v884 = vmul.f32 %v772, %v139
    %v885 = vmul.f32 %v855, %v139
    %v886 = vadd.f32 %v882, %v884
    %v887 = vadd.f32 %v883, %v885
    %v888 = vsel %vm47, %v886, 0.0
    %889 = vadd.xlane.f32.xlu0 %v888
    %v890 = vpop.xlane.xlu0 %889
    %v891 = vsel %vm47, %v887, 0.0
    %892 = vadd.xlane.f32.xlu0 %v891
    %v893 = vpop.xlane.xlu0 %892
    %v894 = vrcp.pop 32.0
    %v895 = vmul.f32 %v890, %v894
    %v896 = vmul.f32 %v893, %v894
    %v897 = vsub.f32 %v886, %v895
    %v898 = vsub.f32 %v887, %v896
    %v899 = vmul.f32 %v897, %v897
    %v900 = vmul.f32 %v898, %v898
    %v901 = vsel %vm47, %v899, 0.0
    %902 = vadd.xlane.f32.xlu0 %v901
    %v903 = vpop.xlane.xlu0 %902
    %v904 = vsel %vm47, %v900, 0.0
    %905 = vadd.xlane.f32.xlu0 %v904
    %v906 = vpop.xlane.xlu0 %905
    %v907 = vmul.f32 %v903, %v894
    %v908 = vmul.f32 %v906, %v894
    %v909 = vadd.f32 %v907, 1e-05
    %v910 = vadd.f32 %v908, 1e-05
    %v911 = vrsqrt.pop %v909
    %v912 = vrsqrt.pop %v910
    %v913 = vmul.f32 %v897, %v911
    %v914 = vmul.f32 %v898, %v912
    %v915 = vld [vmem:[%s5] sm:$0x1]
    %v917 = vlaneseq
    %v918 = vshrl.u32 %v917, 7
    %v919 = vsub.s32 0, %v918
    %v920 = vrot.slane %v915, %v919
    %v922 = vmul.f32 %v913, %v920
    %v923 = vmul.f32 %v914, %v920
    %v924 = vld [vmem:[%s6] sm:$0x1]
    %v926 = vlaneseq
    %v927 = vshrl.u32 %v926, 7
    %v928 = vsub.s32 0, %v927
    %v929 = vrot.slane %v924, %v928
    %v931 = vadd.f32 %v922, %v929
    %v932 = vadd.f32 %v923, %v929
    %933 = vst.msk [vmem:[#allocation2] sm:$0xff] %vm47, %v931
    %934 = vst.msk [vmem:[#allocation2 + $0x8] sm:$0xff] %vm47, %v932
    // Predicated region
    $region30: #{tpu_custom_call.1} parent=1 // pred_check
      _
    $region31: #{tpu_custom_call.1} parent=1 // pred_check_branch
      %936 = sbr.rel (0) target = $region33
    $region32: #{tpu_custom_call.1} parent=1 // pred_region
      %s938 = ssub.s32 256, 256
      %939 = vsyncadd [#allocation3], %s938
      %s940 = sshll.u32 [#allocation2], 4
      %s941 = int_to_ptr.vmem [resolvable:$true] %s940
      %946 = dma.vmem_to_hbm [thread:$0]  %s941, 256, %s7, [#allocation3], 128, 128, 8
    $region33: #{tpu_custom_call.1} parent=1 // pred_fallthru
      _
    // Predicated region
    $region34: #{tpu_custom_call.1} parent=1 // pred_check
      _
    $region35: #{tpu_custom_call.1} parent=1 // pred_check_branch
      %948 = sbr.rel (0) target = $region37
    $region36: #{tpu_custom_call.1} parent=1 // pred_region
      %949 = dma.done [#allocation3], 256
    $region37: #{tpu_custom_call.1} parent=1 // pred_fallthru
      _
    %950 = vsyncpa [#allocation3], 1

</llo_original>
